<compile_context>
chip_gen: v5e
topology: v5e:2x2
jax: 0.10.0
libtpu: 0.0.40
codegen_flags: <defaults>
</compile_context>

<pallas_src>
import jax
import jax.numpy as jnp
from jax.experimental import pallas as pl
from jax.experimental.pallas import tpu as pltpu

_MIB = 1024 * 1024


# --------------------------------------------------------------------------- #
# Fused kernel: one grid step handles a (b_blk, N, F) block (full sequence).
# --------------------------------------------------------------------------- #
def _attention_block_kernel(x_ref, w1_ref, b1_ref, w2row_ref, o_ref):
    b_blk, n, f = x_ref.shape

    # ---- Linear(F, F) + ReLU, fused over the whole batch block (MXU, f32 acc) ----
    if n % 8 == 0:
        # (b_blk, N, F) -> (b_blk*N, F) is a pure sublane re-tiling when N % 8 == 0.
        x2 = x_ref[...].reshape(b_blk * n, f).astype(jnp.float32)
        h = jnp.dot(x2, w1_ref[...], preferred_element_type=jnp.float32)
        h = jnp.maximum(h + b1_ref[...], 0.0)                      # (b_blk*N, F)
        # ---- Linear(F, 1) as VPU multiply + XLU lane reduce (skip 1-col MXU op).
        # b2 is omitted: softmax over N is shift-invariant, it cancels exactly.
        s = jnp.sum(h.reshape(b_blk, n, f) * w2row_ref[...],
                    axis=-1, keepdims=True)                        # (b_blk, N, 1)
    else:
        # Unaligned N: keep the batched layout to avoid a relayout copy.
        h = jnp.einsum("bnf,fg->bng", x_ref[...].astype(jnp.float32), w1_ref[...],
                       preferred_element_type=jnp.float32)
        h = jnp.maximum(h + b1_ref[...], 0.0)
        s = jnp.sum(h * w2row_ref[...], axis=-1, keepdims=True)    # (b_blk, N, 1)

    # ---- Softmax over the sequence axis, per batch row ----
    m = jnp.max(s, axis=1, keepdims=True)                          # (b_blk, 1, 1)
    e = jnp.exp(s - m)                                             # (b_blk, N, 1)
    denom = jnp.sum(e, axis=1, keepdims=True)                      # (b_blk, 1, 1)
    r = pl.reciprocal(denom, approx=True)                          # EUP vrcp seed ...
    r = r * (2.0 - denom * r)                                      # ... + 1 Newton step
    attn = e * r                                                   # (b_blk, N, 1)

    # ---- x * attention_weights (re-read x_ref: no block-sized x temp held live) ----
    o_ref[...] = (x_ref[...].astype(jnp.float32) * attn).astype(o_ref.dtype)


# --------------------------------------------------------------------------- #
# Fallback kernels (N-tiled two-pass softmax) for very large N*F.
# --------------------------------------------------------------------------- #
def _scores_kernel(x_ref, w1_ref, b1_ref, w2row_ref, s_ref):
    # x_ref: (1, n_blk, F); s_ref: (1, n_blk, 1)
    x2 = x_ref[0].astype(jnp.float32)                              # (n_blk, F)
    h = jnp.dot(x2, w1_ref[...], preferred_element_type=jnp.float32)
    h = jnp.maximum(h + b1_ref[...], 0.0)
    s_ref[...] = jnp.sum(h * w2row_ref[...], axis=-1, keepdims=True)[None]


def _apply_kernel(x_ref, w_ref, o_ref):
    o_ref[...] = (x_ref[...].astype(jnp.float32) * w_ref[...]).astype(o_ref.dtype)


# --------------------------------------------------------------------------- #
# Sizing helpers.
# --------------------------------------------------------------------------- #
def _vmem_limit_bytes():
    """Generation-aware scoped-VMEM limit (v5e/v6e: 128 MiB parts, v7x: 64 MiB/TC)."""
    try:
        cap = int(getattr(pltpu.get_tpu_info(), "vmem_capacity_bytes", 64 * _MIB))
    except Exception:
        cap = 64 * _MIB
    if cap >= 100 * _MIB:           # v5e / v6e
        return 96 * _MIB
    return 44 * _MIB                # v7x (and conservative default)


def _pick_batch_block(B, N, F, itemsize, usable_bytes, *, target_step_bytes=8 * _MIB):
    """Batch rows per grid step for the fused kernel, or None -> N-tiled fallback.

    Per-step VMEM live set ~= 2x x block + 2x out block (double-buffered pipeline)
    + one block-sized f32 h temp. Targets ~8 MiB of x+out HBM traffic per step
    (amortizes the ~0.35 us/step overhead), keeps >= 2 steps when B >= 2 so v7x's
    two TensorCores both get work, and uses exact blocks only (the per-batch
    softmax cannot tolerate padded rows).
    """
    per_batch_block = N * F * itemsize
    live_per_batch = 4 * per_batch_block + N * F * 4   # 2x x + 2x out + f32 h temp
    if live_per_batch > usable_bytes:
        return None                                    # even one batch row won't fit
    b_blk = max(1, min(B, target_step_bytes // max(1, 2 * per_batch_block)))
    if B >= 2:
        b_blk = max(1, min(b_blk, B // 2))             # keep the grid >= 2 steps
    while b_blk > 1 and b_blk * live_per_batch > usable_bytes:
        b_blk //= 2
    while B % b_blk:
        b_blk -= 1
    return b_blk


# --------------------------------------------------------------------------- #
# Wrappers.
# --------------------------------------------------------------------------- #
def _attention_fused(x, w1, b1, w2_row, b_blk, vmem_limit):
    B, N, F = x.shape
    resident = pl.Buffered(1)   # constant index_map operands: single-buffer them
    return pl.pallas_call(
        _attention_block_kernel,
        out_shape=jax.ShapeDtypeStruct((B, N, F), x.dtype),
        grid_spec=pltpu.PrefetchScalarGridSpec(
            num_scalar_prefetch=0,
            grid=(B // b_blk,),
            in_specs=[
                pl.BlockSpec((b_blk, N, F), lambda b: (b, 0, 0)),               # x
                pl.BlockSpec((F, F), lambda b: (0, 0), pipeline_mode=resident),  # W1
                pl.BlockSpec((1, F), lambda b: (0, 0), pipeline_mode=resident),  # b1
                pl.BlockSpec((1, F), lambda b: (0, 0), pipeline_mode=resident),  # w2 row
            ],
            out_specs=pl.BlockSpec((b_blk, N, F), lambda b: (b, 0, 0)),
        ),
        compiler_params=pltpu.CompilerParams(
            dimension_semantics=("parallel",),
            vmem_limit_bytes=vmem_limit,
        ),
    )(x, w1, b1, w2_row)


def _attention_ntiled(x, w1, b1, w2_row, vmem_limit, usable_bytes):
    """Two-pass fallback for shapes where a full sequence doesn't fit VMEM."""
    B, N, F = x.shape
    itemsize = x.dtype.itemsize
    n_blk = 1
    for d in range(1, N + 1):                          # largest divisor of N that fits
        if N % d == 0 and (4 * d * F * itemsize + d * F * 4) <= usable_bytes:
            n_blk = d
    resident = pl.Buffered(1)

    # Pass 1: stream x once, emit raw scores (B, N, 1).
    scores = pl.pallas_call(
        _scores_kernel,
        out_shape=jax.ShapeDtypeStruct((B, N, 1), jnp.float32),
        grid_spec=pltpu.PrefetchScalarGridSpec(
            num_scalar_prefetch=0,
            grid=(B, N // n_blk),
            in_specs=[
                pl.BlockSpec((1, n_blk, F), lambda b, n: (b, n, 0)),
                pl.BlockSpec((F, F), lambda b, n: (0, 0), pipeline_mode=resident),
                pl.BlockSpec((1, F), lambda b, n: (0, 0), pipeline_mode=resident),
                pl.BlockSpec((1, F), lambda b, n: (0, 0), pipeline_mode=resident),
            ],
            out_specs=pl.BlockSpec((1, n_blk, 1), lambda b, n: (b, n, 0)),
        ),
        compiler_params=pltpu.CompilerParams(
            dimension_semantics=("parallel", "parallel"),
            vmem_limit_bytes=vmem_limit,
        ),
    )(x, w1, b1, w2_row)

    # Tiny (B, N, 1) softmax over the sequence axis: negligible next to x traffic.
    attn = jax.nn.softmax(scores, axis=1)

    # Pass 2: stream x again and apply the weights.
    return pl.pallas_call(
        _apply_kernel,
        out_shape=jax.ShapeDtypeStruct((B, N, F), x.dtype),
        grid_spec=pltpu.PrefetchScalarGridSpec(
            num_scalar_prefetch=0,
            grid=(B, N // n_blk),
            in_specs=[
                pl.BlockSpec((1, n_blk, F), lambda b, n: (b, n, 0)),
                pl.BlockSpec((1, n_blk, 1), lambda b, n: (b, n, 0)),
            ],
            out_specs=pl.BlockSpec((1, n_blk, F), lambda b, n: (b, n, 0)),
        ),
        compiler_params=pltpu.CompilerParams(
            dimension_semantics=("parallel", "parallel"),
            vmem_limit_bytes=vmem_limit,
        ),
    )(x, attn)


def attention_layer(x, w1, b1, w2, b2=None):
    """Forward pass of AttentionLayer.

    x: (B, N, F); w1: (F, F) (x @ w1 convention); b1: (1, F); w2: (F, 1).
    b2 (the scalar bias of the second Linear) is accepted for API parity but never
    sent to the kernel: softmax over the sequence axis makes it cancel exactly.
    """
    del b2
    B, N, F = x.shape
    itemsize = x.dtype.itemsize
    vmem_limit = _vmem_limit_bytes()
    # Budget left for the per-step x/out/h working set after the single-buffered
    # W1 (F*F f32), the tiny b1/w2 tiles and general slack.
    usable = max(vmem_limit - F * F * 4 - 4 * _MIB, 1 * _MIB)

    w2_row = w2.reshape(1, F)            # present the (F, 1) weight as a lane-major row

    b_blk = _pick_batch_block(B, N, F, itemsize, usable)
    if b_blk is None:
        return _attention_ntiled(x, w1, b1, w2_row, vmem_limit, usable)
    return _attention_fused(x, w1, b1, w2_row, b_blk, vmem_limit)


def attention_layer_ref(x, w1, b1, w2, b2):
    h = jnp.maximum(jnp.einsum("bnf,fg->bng", x, w1) + b1[0], 0.0)
    s = jnp.einsum("bnf,fo->bno", h, w2) + b2[0]
    w = jax.nn.softmax(s, axis=1)
    return x * w


if __name__ == "__main__":
    B, N, F = 2, 8, 32

    key = jax.random.PRNGKey(0)
    kx, k1, k2, k3, k4 = jax.random.split(key, 5)

    x = jax.random.normal(kx, (B, N, F), dtype=jnp.float32)

    # Deterministic parameter init (synthetic; mimics small uniform init).
    bound1 = 1.0 / (F ** 0.5)
    w1 = jax.random.uniform(k1, (F, F), jnp.float32, -bound1, bound1)
    b1 = jax.random.uniform(k2, (1, F), jnp.float32, -bound1, bound1)
    w2 = jax.random.uniform(k3, (F, 1), jnp.float32, -bound1, bound1)
    b2 = jax.random.uniform(k4, (1, 1), jnp.float32, -bound1, bound1)

    out = attention_layer(x, w1, b1, w2, b2)
    out = jax.block_until_ready(out)

    ref = attention_layer_ref(x, w1, b1, w2, b2)
    assert out.shape == (B, N, F)
    assert jnp.allclose(out, ref, atol=1e-5, rtol=1e-5), "mismatch vs reference"

    print("KERNEL_OK")
</pallas_src>

<mosaic_0001>
module attributes {stable_mosaic.version = 11 : i64} {
  func.func @_attention_block_kernel(%arg0: i32, %arg1: memref<1x8x32xf32, #tpu.memory_space<vmem>>, %arg2: memref<32x32xf32, #tpu.memory_space<vmem>>, %arg3: memref<1x32xf32, #tpu.memory_space<vmem>>, %arg4: memref<1x32xf32, #tpu.memory_space<vmem>>, %arg5: memref<1x8x32xf32, #tpu.memory_space<vmem>>) attributes {dimension_semantics = [#tpu.dimension_semantics<parallel>], iteration_bounds = array<i64: 2>, scalar_prefetch = 0 : i64, scratch_operands = 0 : i64, tpu.core_type = #tpu.core_type<tc>, window_params = [{transform_indices = @transform_0, window_bounds = array<i64: 1, 8, 32>}, {pipeline_mode = #tpu.pipeline_mode<synchronous>, transform_indices = @transform_1, window_bounds = array<i64: 32, 32>}, {pipeline_mode = #tpu.pipeline_mode<synchronous>, transform_indices = @transform_2, window_bounds = array<i64: 1, 32>}, {pipeline_mode = #tpu.pipeline_mode<synchronous>, transform_indices = @transform_3, window_bounds = array<i64: 1, 32>}, {transform_indices = @transform_4, window_bounds = array<i64: 1, 8, 32>}]} {
    %c0 = arith.constant 0 : index
    %c0_0 = arith.constant 0 : index
    %c0_1 = arith.constant 0 : index
    %0 = vector.load %arg1[%c0, %c0_0, %c0_1] : memref<1x8x32xf32, #tpu.memory_space<vmem>>, vector<1x8x32xf32>
    %1 = vector.shape_cast %0 : vector<1x8x32xf32> to vector<8x32xf32>
    %c0_2 = arith.constant 0 : index
    %c0_3 = arith.constant 0 : index
    %2 = vector.load %arg2[%c0_2, %c0_3] : memref<32x32xf32, #tpu.memory_space<vmem>>, vector<32x32xf32>
    %cst = arith.constant dense<0.000000e+00> : vector<8x32xf32>
    %3 = tpu.matmul %1, %2, %cst {dimension_numbers = #tpu.dot_dimension_numbers<[1], [0], [0], [1], [0, 0, 1, 1], [], []>} : vector<8x32xf32>, vector<32x32xf32>, vector<8x32xf32> -> vector<8x32xf32>
    %c0_4 = arith.constant 0 : index
    %c0_5 = arith.constant 0 : index
    %4 = vector.load %arg3[%c0_4, %c0_5] : memref<1x32xf32, #tpu.memory_space<vmem>>, vector<1x32xf32>
    %5 = vector.broadcast %4 : vector<1x32xf32> to vector<8x32xf32>
    %6 = arith.addf %3, %5 : vector<8x32xf32>
    %cst_6 = arith.constant 0.000000e+00 : f32
    %7 = vector.broadcast %cst_6 : f32 to vector<8x32xf32>
    %8 = arith.maximumf %6, %7 : vector<8x32xf32>
    %9 = vector.shape_cast %8 : vector<8x32xf32> to vector<1x8x32xf32>
    %c0_7 = arith.constant 0 : index
    %c0_8 = arith.constant 0 : index
    %10 = vector.load %arg4[%c0_7, %c0_8] : memref<1x32xf32, #tpu.memory_space<vmem>>, vector<1x32xf32>
    %11 = vector.shape_cast %10 : vector<1x32xf32> to vector<1x1x32xf32>
    %12 = vector.broadcast %11 : vector<1x1x32xf32> to vector<1x8x32xf32>
    %13 = arith.mulf %9, %12 : vector<1x8x32xf32>
    %cst_9 = arith.constant dense<0.000000e+00> : vector<1x8xf32>
    %14 = vector.multi_reduction <add>, %13, %cst_9 [2] : vector<1x8x32xf32> to vector<1x8xf32>
    %15 = vector.shape_cast %14 : vector<1x8xf32> to vector<1x8x1xf32>
    %cst_10 = arith.constant dense<0xFF800000> : vector<1x1xf32>
    %16 = vector.multi_reduction <maximumf>, %15, %cst_10 [1] : vector<1x8x1xf32> to vector<1x1xf32>
    %17 = vector.shape_cast %16 : vector<1x1xf32> to vector<1x1x1xf32>
    %18 = vector.broadcast %17 : vector<1x1x1xf32> to vector<1x8x1xf32>
    %19 = arith.subf %15, %18 : vector<1x8x1xf32>
    %20 = math.exp %19 : vector<1x8x1xf32>
    %cst_11 = arith.constant dense<0.000000e+00> : vector<1x1xf32>
    %21 = vector.multi_reduction <add>, %20, %cst_11 [1] : vector<1x8x1xf32> to vector<1x1xf32>
    %22 = vector.shape_cast %21 : vector<1x1xf32> to vector<1x1x1xf32>
    %23 = tpu.reciprocal %22 {approx = true} : vector<1x1x1xf32> -> vector<1x1x1xf32>
    %24 = arith.mulf %22, %23 : vector<1x1x1xf32>
    %cst_12 = arith.constant 2.000000e+00 : f32
    %25 = vector.broadcast %cst_12 : f32 to vector<1x1x1xf32>
    %26 = arith.subf %25, %24 : vector<1x1x1xf32>
    %27 = arith.mulf %23, %26 : vector<1x1x1xf32>
    %28 = vector.broadcast %27 : vector<1x1x1xf32> to vector<1x8x1xf32>
    %29 = arith.mulf %20, %28 : vector<1x8x1xf32>
    %c0_13 = arith.constant 0 : index
    %c0_14 = arith.constant 0 : index
    %c0_15 = arith.constant 0 : index
    %30 = vector.load %arg1[%c0_13, %c0_14, %c0_15] : memref<1x8x32xf32, #tpu.memory_space<vmem>>, vector<1x8x32xf32>
    %31 = vector.broadcast %29 : vector<1x8x1xf32> to vector<1x8x32xf32>
    %32 = arith.mulf %30, %31 : vector<1x8x32xf32>
    %c0_16 = arith.constant 0 : index
    %c0_17 = arith.constant 0 : index
    %c0_18 = arith.constant 0 : index
    %33 = vector.load %arg5[%c0_16, %c0_17, %c0_18] : memref<1x8x32xf32, #tpu.memory_space<vmem>>, vector<1x8x32xf32>
    tpu.vector_store %arg5[%c0_16, %c0_17, %c0_18], %32 {strides = array<i32>} : memref<1x8x32xf32, #tpu.memory_space<vmem>>, vector<1x8x32xf32>,
    return
  }
  func.func @transform_0(%arg0: i32) -> (i32, i32, i32) {
    %c0_i32 = arith.constant 0 : i32
    %c0_i32_0 = arith.constant 0 : i32
    %c0_i32_1 = arith.constant 0 : i32
    return %arg0, %c0_i32, %c0_i32_0 : i32, i32, i32
  }
  func.func @transform_1(%arg0: i32) -> (i32, i32) {
    %c0_i32 = arith.constant 0 : i32
    %c0_i32_0 = arith.constant 0 : i32
    %c0_i32_1 = arith.constant 0 : i32
    return %c0_i32, %c0_i32_0 : i32, i32
  }
  func.func @transform_2(%arg0: i32) -> (i32, i32) {
    %c0_i32 = arith.constant 0 : i32
    %c0_i32_0 = arith.constant 0 : i32
    %c0_i32_1 = arith.constant 0 : i32
    return %c0_i32, %c0_i32_0 : i32, i32
  }
  func.func @transform_3(%arg0: i32) -> (i32, i32) {
    %c0_i32 = arith.constant 0 : i32
    %c0_i32_0 = arith.constant 0 : i32
    %c0_i32_1 = arith.constant 0 : i32
    return %c0_i32, %c0_i32_0 : i32, i32
  }
  func.func @transform_4(%arg0: i32) -> (i32, i32, i32) {
    %c0_i32 = arith.constant 0 : i32
    %c0_i32_0 = arith.constant 0 : i32
    %c0_i32_1 = arith.constant 0 : i32
    return %arg0, %c0_i32, %c0_i32_0 : i32, i32, i32
  }
}

</mosaic_0001>

<llo_original>
// kernel: tpu_custom_call.1
$region0: #{tpu_custom_call.1}
  #allocation0 [shape = 'u32[]', space=smem, size = 0x4, offset = 0x4, fixed_abs, tag = 'smem constant byte address 0x4 - core index']
  #allocation1 [shape = 'u32[72,128]{1,0:T(1,128)}', space=vmem, size = 0x9000, scoped, tag = 'internal scratch']
  %s0 = inlined_call_operand.hbm [shape: f32[2,8,32], index: 0, kind: input, shape index: {}]
  %s1 = inlined_call_operand.hbm [shape: f32[32,32], index: 1, kind: input, shape index: {}]
  %s2 = inlined_call_operand.vmem [shape: f32[1,32], index: 2, kind: input, shape index: {}]
  %s3 = inlined_call_operand.vmem [shape: f32[1,32], index: 3, kind: input, shape index: {}]
  %s4 = inlined_call_operand.hbm [shape: f32[2,8,32], index: 4, kind: output, shape index: {}]
  %s5 = sld [smem:[#allocation0]]
  $region57: #{tpu_custom_call.1} parent=0
    _
  %s7 = ssub.s32 1, %s5
  %s8 = scalar_select 0, %s7, %s5
  $region1: #{tpu_custom_call.1} parent=0
    #allocation2 [shape = 'u8[8192]{0}', space=vmem, size = 0x2000, scoped, tag = 'input window, operand 0']
    #allocation3 [shape = 's32[2]{0}', space=sflag, size = 0x8, scoped, tag = 'scoped memory for tpu_custom_call.1']
    #allocation4 [shape = 's32[2]{0}', space=sflag, size = 0x8, scoped, tag = 'scoped memory for tpu_custom_call.1']
    #allocation5 [shape = 'u8[16384]{0}', space=vmem, size = 0x4000, scoped, tag = 'input window, operand 1, single buffered']
    #allocation6 [shape = 's32[1]{0}', space=sflag, size = 0x4, scoped, tag = 'scoped memory for tpu_custom_call.1']
    #allocation7 [shape = 'u8[8192]{0}', space=vmem, size = 0x2000, scoped, tag = 'output window, operand 0']
    %9 = vsyncpa [#allocation3], 0
    %s10 = scalar_lea.sflag [#allocation3], 1
    %11 = vsyncpa %s10, 0
    %12 = vsyncpa [#allocation6], 0
    %13 = vsyncpa [#allocation4], 0
    %s14 = scalar_lea.sflag [#allocation4], 1
    %15 = vsyncpa %s14, 0
    loop: start=0, step=1, limit=4
    $region2: #{tpu_custom_call.1} parent=1 // loop_pre_header
      _
    $region3: #{tpu_custom_call.1} parent=1 // loop_header
      %s17 = sphi 0, %s21
      %p18 = scmp.ge.s32.totalorder %s17, 4
      %s27 = sphi 0, %s29
      %s30 = sphi 0, %s27
      %s31 = sphi 0, %s30
      %s47 = sphi 0, %s31
      %s51 = sphi 0, %s51
      %s53 = sphi 0, %s51
      %s54 = sphi 0, %s53
      %s68 = sphi 0, %s54
      %s72 = sphi 0, %s72
      %s74 = sphi 0, %s72
      %s75 = sphi 0, %s74
      %s89 = sphi 0, %s75
      %s93 = sphi 0, %s93
      %s95 = sphi 0, %s93
      %s96 = sphi 0, %s95
      %s110 = sphi 0, %s96
      %s116 = sphi 0, %s118
      %s119 = sphi 0, %s116
      %s120 = sphi 0, %s119
      %s136 = sphi 0, %s120
    $region4: #{tpu_custom_call.1} parent=1 // loop_header_branch
      %20 = sbr.rel (%p18) target = $region8
    $region5: #{tpu_custom_call.1} parent=1 // loop_body
      %s22 = ssub.s32 %s17, 1
      %s23 = ssub.s32 %s17, 2
      %s24 = sadd.s32 %s17, 1
      %s25 = ssub.s32 %s17, %s24
      %p26 = scmp.eq.s32.totalorder %s25, 0
      %s28 = sadd.s32 %s27, 1
      %s29 = scalar_select %p26, %s27, %s28
      %p32 = pneg %p26
      %p33 = scmp.eq.s32.totalorder %s17, 1
      %p34 = por %p32, %p33
      %p35 = scmp.ne.s32.totalorder %s27, %s30
      %p36 = scmp.eq.s32.totalorder %s17, 0
      %p37 = por %p35, %p36
      %p38 = scmp.ne.s32.totalorder %s27, %s30
      %p39 = scmp.eq.s32.totalorder %s22, 1
      %p40 = por %p38, %p39
      %p41 = scmp.ne.s32.totalorder %s30, %s31
      %p42 = scmp.eq.s32.totalorder %s22, 0
      %p43 = por %p41, %p42
      %p44 = scmp.ne.s32.totalorder %s30, %s31
      %p45 = scmp.eq.s32.totalorder %s23, 1
      %p46 = por %p44, %p45
      %p48 = scmp.ne.s32.totalorder %s31, %s47
      %p49 = scmp.eq.s32.totalorder %s23, 0
      %p50 = por %p48, %p49
      %s52 = sadd.s32 %s51, 1
      %p55 = scmp.eq.s32.totalorder %s17, 1
      %p56 = scmp.ne.s32.totalorder %s51, %s53
      %p57 = scmp.eq.s32.totalorder %s17, 0
      %p58 = por %p56, %p57
      %p59 = scmp.ne.s32.totalorder %s51, %s53
      %p60 = scmp.eq.s32.totalorder %s22, 1
      %p61 = por %p59, %p60
      %p62 = scmp.ne.s32.totalorder %s53, %s54
      %p63 = scmp.eq.s32.totalorder %s22, 0
      %p64 = por %p62, %p63
      %p65 = scmp.ne.s32.totalorder %s53, %s54
      %p66 = scmp.eq.s32.totalorder %s23, 1
      %p67 = por %p65, %p66
      %p69 = scmp.ne.s32.totalorder %s54, %s68
      %p70 = scmp.eq.s32.totalorder %s23, 0
      %p71 = por %p69, %p70
      %s73 = sadd.s32 %s72, 1
      %p76 = scmp.eq.s32.totalorder %s17, 1
      %p77 = scmp.ne.s32.totalorder %s72, %s74
      %p78 = scmp.eq.s32.totalorder %s17, 0
      %p79 = por %p77, %p78
      %p80 = scmp.ne.s32.totalorder %s72, %s74
      %p81 = scmp.eq.s32.totalorder %s22, 1
      %p82 = por %p80, %p81
      %p83 = scmp.ne.s32.totalorder %s74, %s75
      %p84 = scmp.eq.s32.totalorder %s22, 0
      %p85 = por %p83, %p84
      %p86 = scmp.ne.s32.totalorder %s74, %s75
      %p87 = scmp.eq.s32.totalorder %s23, 1
      %p88 = por %p86, %p87
      %p90 = scmp.ne.s32.totalorder %s75, %s89
      %p91 = scmp.eq.s32.totalorder %s23, 0
      %p92 = por %p90, %p91
      %s94 = sadd.s32 %s93, 1
      %p97 = scmp.eq.s32.totalorder %s17, 1
      %p98 = scmp.ne.s32.totalorder %s93, %s95
      %p99 = scmp.eq.s32.totalorder %s17, 0
      %p100 = por %p98, %p99
      %p101 = scmp.ne.s32.totalorder %s93, %s95
      %p102 = scmp.eq.s32.totalorder %s22, 1
      %p103 = por %p101, %p102
      %p104 = scmp.ne.s32.totalorder %s95, %s96
      %p105 = scmp.eq.s32.totalorder %s22, 0
      %p106 = por %p104, %p105
      %p107 = scmp.ne.s32.totalorder %s95, %s96
      %p108 = scmp.eq.s32.totalorder %s23, 1
      %p109 = por %p107, %p108
      %p111 = scmp.ne.s32.totalorder %s96, %s110
      %p112 = scmp.eq.s32.totalorder %s23, 0
      %p113 = por %p111, %p112
      %s114 = ssub.s32 %s17, %s24
      %p115 = scmp.eq.s32.totalorder %s114, 0
      %s117 = sadd.s32 %s116, 1
      %s118 = scalar_select %p115, %s116, %s117
      %p121 = pneg %p115
      %p122 = scmp.eq.s32.totalorder %s17, 1
      %p123 = por %p121, %p122
      %p124 = scmp.ne.s32.totalorder %s116, %s119
      %p125 = scmp.eq.s32.totalorder %s17, 0
      %p126 = por %p124, %p125
      %p127 = scmp.ne.s32.totalorder %s116, %s119
      %p128 = scmp.eq.s32.totalorder %s22, 1
      %p129 = por %p127, %p128
      %p130 = scmp.ne.s32.totalorder %s119, %s120
      %p131 = scmp.eq.s32.totalorder %s22, 0
      %p132 = por %p130, %p131
      %p133 = scmp.ne.s32.totalorder %s119, %s120
      %p134 = scmp.eq.s32.totalorder %s23, 1
      %p135 = por %p133, %p134
      %p137 = scmp.ne.s32.totalorder %s120, %s136
      %p138 = scmp.eq.s32.totalorder %s23, 0
      %p139 = por %p137, %p138
      %p140 = scmp.le.s32.totalorder 1, %s17
      %p141 = scmp.lt.s32.totalorder %s17, 3
      %p142 = pnand %p140, %p141
      %p143 = pneg %p142
      // Predicated region
      $region9: #{tpu_custom_call.1} parent=5 // pred_check
        _
      $region10: #{tpu_custom_call.1} parent=5 // pred_check_branch
        %145 = sbr.rel (%p142) target = $region12
      $region11: #{tpu_custom_call.1} parent=5 // pred_region
        %s146 = ssub.s32 %s17, 1
        // Predicated region
        $region13: #{tpu_custom_call.1} parent=11 // pred_check
          %p147 = pneg %p64
        $region14: #{tpu_custom_call.1} parent=11 // pred_check_branch
          %149 = sbr.rel (%p147) target = $region16
        $region15: #{tpu_custom_call.1} parent=11 // pred_region
          %151 = vsyncadd [#allocation6], 0
          %s152 = sshll.u32 %s1, 4
          %s153 = int_to_ptr.hbm [resolvable:$true] %s152
          %s154 = sshll.u32 [#allocation5], 4
          %s155 = int_to_ptr.vmem [resolvable:$true] %s154
          %160 = dma.hbm_to_vmem [thread:$0]  %s153, 512, %s155, [#allocation6], 128, 128, 8
        $region16: #{tpu_custom_call.1} parent=11 // pred_fallthru
          _
        // Predicated region
        $region17: #{tpu_custom_call.1} parent=11 // pred_check
          %p161 = pneg %p85
        $region18: #{tpu_custom_call.1} parent=11 // pred_check_branch
          %163 = sbr.rel (%p161) target = $region20
        $region19: #{tpu_custom_call.1} parent=11 // pred_region
          _
        $region20: #{tpu_custom_call.1} parent=11 // pred_fallthru
          _
        // Predicated region
        $region21: #{tpu_custom_call.1} parent=11 // pred_check
          %p164 = pneg %p106
        $region22: #{tpu_custom_call.1} parent=11 // pred_check_branch
          %166 = sbr.rel (%p164) target = $region24
        $region23: #{tpu_custom_call.1} parent=11 // pred_region
          _
        $region24: #{tpu_custom_call.1} parent=11 // pred_fallthru
          _
      $region12: #{tpu_custom_call.1} parent=5 // pred_fallthru
        _
      %p167 = scmp.lt.s32.totalorder %s17, 2
      // Predicated region
      $region25: #{tpu_custom_call.1} parent=5 // pred_check
        %p168 = pneg %p167
      $region26: #{tpu_custom_call.1} parent=5 // pred_check_branch
        %170 = sbr.rel (%p168) target = $region28
      $region27: #{tpu_custom_call.1} parent=5 // pred_region
        // Predicated region
        $region29: #{tpu_custom_call.1} parent=27 // pred_check
          %p171 = pneg %p37
        $region30: #{tpu_custom_call.1} parent=27 // pred_check_branch
          %173 = sbr.rel (%p171) target = $region32
        $region31: #{tpu_custom_call.1} parent=27 // pred_region
          %s174 = sand.u32 %s27, 1
          %s175 = scalar_lea.sflag [#allocation3], %s174
          %s176 = sand.u32 %s27, 1
          %s177 = smul.addr %s176, 8
          %s178 = scalar_lea.vmem [#allocation2], %s177
          %180 = vsyncadd %s175, 0
          %s181 = smul.addr %s17, 8
          %s182 = scalar_lea.hbm %s0, %s181
          %s184 = sshll.u32 %s182, 4
          %s185 = int_to_ptr.hbm [resolvable:$true] %s184
          %s186 = sshll.u32 %s178, 4
          %s187 = int_to_ptr.vmem [resolvable:$true] %s186
          %189 = dma.hbm_to_vmem [thread:$0]  %s185, 128, %s187, %s175
        $region32: #{tpu_custom_call.1} parent=27 // pred_fallthru
          _
      $region28: #{tpu_custom_call.1} parent=5 // pred_fallthru
        _
      %p190 = scmp.le.s32.totalorder 1, %s17
      %p191 = scmp.lt.s32.totalorder %s17, 3
      %p192 = pnand %p190, %p191
      %p193 = pneg %p192
      // Predicated region
      $region33: #{tpu_custom_call.1} parent=5 // pred_check
        _
      $region34: #{tpu_custom_call.1} parent=5 // pred_check_branch
        %195 = sbr.rel (%p192) target = $region36
      $region35: #{tpu_custom_call.1} parent=5 // pred_region
        %s196 = ssub.s32 %s17, 1
        %s197 = sand.u32 %s30, 1
        %s198 = scalar_lea.sflag [#allocation3], %s197
        %s199 = sand.u32 %s30, 1
        %s200 = smul.addr %s199, 8
        %s201 = scalar_lea.vmem [#allocation2], %s200
        // Predicated region
        $region37: #{tpu_custom_call.1} parent=35 // pred_check
          %p202 = pneg %p43
        $region38: #{tpu_custom_call.1} parent=35 // pred_check_branch
          %204 = sbr.rel (%p202) target = $region40
        $region39: #{tpu_custom_call.1} parent=35 // pred_region
          %206 = dma.done %s198, 128
        $region40: #{tpu_custom_call.1} parent=35 // pred_fallthru
          _
        // Predicated region
        $region41: #{tpu_custom_call.1} parent=35 // pred_check
          %p207 = pneg %p64
        $region42: #{tpu_custom_call.1} parent=35 // pred_check_branch
          %209 = sbr.rel (%p207) target = $region44
        $region43: #{tpu_custom_call.1} parent=35 // pred_region
          %211 = dma.done [#allocation6], 512
        $region44: #{tpu_custom_call.1} parent=35 // pred_fallthru
          _
        %s212 = sand.u32 %s30, 1
        %s213 = scalar_lea.sflag [#allocation3], %s212
        %s214 = sand.u32 %s30, 1
        %s215 = smul.addr %s214, 8
        %s216 = scalar_lea.vmem [#allocation2], %s215
        %p217 = pneg %p43
        %p218 = pneg %p40
        %p219 = pneg %p64
        %p220 = pneg %p61
        %p221 = pneg %p85
        %p222 = pneg %p82
        %p223 = pneg %p106
        %p224 = pneg %p103
        %p225 = pneg %p132
        %p226 = pneg %p129
        %s227 = sand.u32 %s119, 1
        %s228 = scalar_lea.sflag [#allocation4], %s227
        %s229 = sand.u32 %s119, 1
        %s230 = smul.addr %s229, 8
        %s231 = scalar_lea.vmem [#allocation7], %s230
        %v232 = vld [vmem:[%s201] sm:$0xff]
        %v233 = vld [vmem:[#allocation5] sm:$0xff]
        %v234 = vld [vmem:[#allocation5 + $0x8] sm:$0xff]
        %v235 = vld [vmem:[#allocation5 + $0x10] sm:$0xff]
        %v236 = vld [vmem:[#allocation5 + $0x18] sm:$0xff]
        %v237 = vld [vmem:[%s2] sm:$0x1]
        %v239 = vperm.slane %v237, 0
        %vm241 = vcmask 261120
        %v243 = vsel %vm241, %v232, 0
        %245 = vmatpush.msra.mxu0 0.0
        %246 = vmatpush.msra.mxu0 0.0
        %247 = vmatpush.msra.mxu0 0.0
        %248 = vmatpush.msra.mxu0 0.0
        %249 = vmatpush.msra.mxu0 0.0
        %250 = vmatpush.msra.mxu0 0.0
        %251 = vmatpush.msra.mxu0 0.0
        %252 = vmatpush.msra.mxu0 0.0
        %253 = vmatpush.msra.mxu0 0.0
        %254 = vmatpush.msra.mxu0 0.0
        %255 = vmatpush.msra.mxu0 0.0
        %256 = vmatpush.msra.mxu0 0.0
        %257 = vmatpush.msra.mxu0 %v236
        %258 = vmatpush.msra.mxu0 %v235
        %259 = vmatpush.msra.mxu0 %v234
        %260 = vmatpush.msra.mxu0 %v233
        %261 = vmatmul.f32.gmra.mxu0 %v243
        %v262 = vpop.f32.mrf.mxu0
        %v263 = vadd.f32 %v239, %v262
        %264 = vdwg.mxu0
        %v265 = vmax.f32 %v263, 0.0
        %v266 = vld [vmem:[%s3] sm:$0x1]
        %v268 = vperm.slane %v266, 0
        %v270 = vmul.f32 %v265, %v268
        %v271 = vsel %vm241, %v270, 0.0
        %272 = vadd.xlane.f32.xlu0 %v271
        %v273 = vpop.xlane.xlu0 %272
        %v274 = vrot.slane %v273, 4
        %v275 = vmax.f32 %v273, %v274
        %v276 = vrot.slane %v275, 2
        %v277 = vmax.f32 %v275, %v276
        %v278 = vrot.slane %v277, 1
        %v279 = vmax.f32 %v277, %v278
        %v280 = vsub.f32 %v273, %v279
        %v281 = vmul.f32 %v280, 1.442695
        %v282 = vpow.pop %v281
        %v283 = vrot.slane %v282, 4
        %v284 = vadd.f32 %v282, %v283
        %v285 = vrot.slane %v284, 2
        %v286 = vadd.f32 %v284, %v285
        %v287 = vrot.slane %v286, 1
        %v288 = vadd.f32 %v286, %v287
        %v289 = vrcp.pop %v288
        %v290 = vmul.f32 %v288, %v289
        %v291 = vsub.f32 2.0, %v290
        %v292 = vmul.f32 %v289, %v291
        %v293 = vmul.f32 %v282, %v292
        %v294 = vmul.f32 %v232, %v293
        %295 = vst.msk [vmem:[%s231] sm:$0xff] %vm241, %v294
        %s296 = sand.u32 %s119, 1
        %s297 = scalar_lea.sflag [#allocation4], %s296
        %s298 = sand.u32 %s119, 1
        %s299 = smul.addr %s298, 8
        %s300 = scalar_lea.vmem [#allocation7], %s299
        // Predicated region
        $region45: #{tpu_custom_call.1} parent=35 // pred_check
          %p301 = pneg %p129
        $region46: #{tpu_custom_call.1} parent=35 // pred_check_branch
          %303 = sbr.rel (%p301) target = $region48
        $region47: #{tpu_custom_call.1} parent=35 // pred_region
          %305 = vsyncadd %s297, 0
          %s306 = smul.addr %s22, 8
          %s307 = scalar_lea.hbm %s4, %s306
          %s309 = sshll.u32 %s300, 4
          %s310 = int_to_ptr.vmem [resolvable:$true] %s309
          %s311 = sshll.u32 %s307, 4
          %s312 = int_to_ptr.hbm [resolvable:$true] %s311
          %314 = dma.vmem_to_hbm [thread:$0]  %s310, 128, %s312, %s297
        $region48: #{tpu_custom_call.1} parent=35 // pred_fallthru
          _
      $region36: #{tpu_custom_call.1} parent=5 // pred_fallthru
        _
      %p315 = scmp.le.s32.totalorder 2, %s17
      // Predicated region
      $region49: #{tpu_custom_call.1} parent=5 // pred_check
        %p316 = pneg %p315
      $region50: #{tpu_custom_call.1} parent=5 // pred_check_branch
        %318 = sbr.rel (%p316) target = $region52
      $region51: #{tpu_custom_call.1} parent=5 // pred_region
        %s319 = ssub.s32 %s17, 2
        // Predicated region
        $region53: #{tpu_custom_call.1} parent=51 // pred_check
          %p320 = pneg %p135
        $region54: #{tpu_custom_call.1} parent=51 // pred_check_branch
          %322 = sbr.rel (%p320) target = $region56
        $region55: #{tpu_custom_call.1} parent=51 // pred_region
          %s323 = sand.u32 %s120, 1
          %s324 = scalar_lea.sflag [#allocation4], %s323
          %s325 = sand.u32 %s120, 1
          %s326 = smul.addr %s325, 8
          %s327 = scalar_lea.vmem [#allocation7], %s326
          %329 = dma.done %s324, 128
        $region56: #{tpu_custom_call.1} parent=51 // pred_fallthru
          _
      $region52: #{tpu_custom_call.1} parent=5 // pred_fallthru
        _
    $region6: #{tpu_custom_call.1} parent=1 // loop_footer
      %s21 = sadd.s32 1, %s17
    $region7: #{tpu_custom_call.1} parent=1 // loop_footer_branch
      %16 = sbr.rel target = $region3
    $region8: #{tpu_custom_call.1} parent=1 // loop_exit
      _
    %330 = vsyncpa [#allocation3], 1
    %s331 = scalar_lea.sflag [#allocation3], 1
    %332 = vsyncpa %s331, 1
    %333 = vsyncpa [#allocation6], 1
    %334 = vsyncpa [#allocation4], 1
    %s335 = scalar_lea.sflag [#allocation4], 1
    %336 = vsyncpa %s335, 1

</llo_original>
